<compile_context>
chip_gen: v6e
topology: v6e:2x2x1
jax: 0.10.0
libtpu: 0.0.40
codegen_flags: <defaults>
</compile_context>

<pallas_src>
import functools

import jax
import jax.numpy as jnp
from jax import lax
from jax.experimental import pallas as pl
from jax.experimental.pallas import tpu as pltpu


# ---------------------------------------------------------------------------
# One-time probe of pltpu.roll's rotation direction.  The depthwise conv pairs
# the two W shifts with *different* taps, so we read the convention off the
# hardware instead of assuming it (cheap: one (8,128) roll, cached).
# ---------------------------------------------------------------------------
def _probe_roll_kernel(x_ref, o_ref):
    o_ref[...] = pltpu.roll(x_ref[...], 1, axis=0)


@functools.lru_cache(maxsize=None)
def _roll_moves_to_higher_index() -> bool:
    x = jnp.zeros((8, 128), jnp.float32).at[1, 0].set(1.0)
    y = pl.pallas_call(
        _probe_roll_kernel,
        out_shape=jax.ShapeDtypeStruct((8, 128), jnp.float32),
    )(x)
    return bool(y[2, 0] == 1.0)   # True -> same convention as jnp.roll


# ---------------------------------------------------------------------------
# Kernel: one image per grid step.  x_ref block: (1, H, Wp, C), Wp % 8 == 0.
# ---------------------------------------------------------------------------
def _middle_flow_kernel(x_ref,
                        dw1_ref, pw1_ref, b1_ref,
                        dw2_ref, pw2_ref, b2_ref,
                        dw3_ref, pw3_ref, b3_ref,
                        out_ref,
                        pad_ref,
                        *, shift_back, shift_fwd, valid_w):
    H, Wp, C = x_ref.shape[1], x_ref.shape[2], x_ref.shape[3]

    x = x_ref[0].astype(jnp.float32)                         # (H, Wp, C)

    # Column-index masks (hoisted out of the three blocks).
    col = lax.broadcasted_iota(jnp.int32, (Wp, C), 0)        # (Wp, C)
    mask_back = (col > 0).astype(jnp.float32)                # kills wrapped col 0
    mask_fwd = (col < Wp - 1).astype(jnp.float32)            # kills wrapped col Wp-1
    valid = (col < valid_w).astype(jnp.float32) if valid_w != Wp else None

    # H-only padded scratch (H+2, Wp, C): the two border rows are zeroed once
    # per image and never rewritten; interior rows are overwritten each block.
    # No full memset, no sublane-offset stores.
    zero_row = jnp.zeros((Wp, C), jnp.float32)
    pad_ref[0] = zero_row
    pad_ref[H + 1] = zero_row

    def sep_block(t, dw_ref, pw_ref, b_ref):
        # ReLU on the VPU (kept in f32 — bf16 only at the MXU boundary, v5e).
        t = jnp.maximum(t, 0.0)
        # Re-zero the W padding columns so they keep acting as conv zero-pad.
        if valid is not None:
            t = t * valid

        # Depthwise 3x3, padding=1.  H shifts = free H-offset reads of the
        # padded scratch; W shifts = XLU rolls with the border mask folded
        # into the (Wp, C) tap coefficient.  Everything stays aligned.
        pad_ref[1:H + 1, :, :] = t
        dwk = dw_ref[...].astype(jnp.float32)                # (3, 3, C)

        acc = jnp.zeros((H, Wp, C), jnp.float32)
        for i in range(3):
            row = pad_ref[i:i + H, :, :]                     # (H, Wp, C), aligned
            acc = acc + row * dwk[i, 1, :]
            acc = acc + pltpu.roll(row, shift_back, axis=1) * (mask_back * dwk[i, 0, :])
            acc = acc + pltpu.roll(row, shift_fwd, axis=1) * (mask_fwd * dwk[i, 2, :])

        # Pointwise 1x1 conv on the MXU: bf16 operands, f32 accumulation.
        # BN scale is already folded into pw; only the bias is added here.
        # Wp % 8 == 0 makes the (H*Wp, C) reshape a pure relabeling.
        y = jnp.dot(acc.reshape(H * Wp, C).astype(jnp.bfloat16),
                    pw_ref[...],
                    preferred_element_type=jnp.float32)      # (H*Wp, C) f32
        y = y + b_ref[...]                                   # BN bias (1, C)
        return y.reshape(H, Wp, C)

    t = sep_block(x, dw1_ref, pw1_ref, b1_ref)
    t = sep_block(t, dw2_ref, pw2_ref, b2_ref)
    t = sep_block(t, dw3_ref, pw3_ref, b3_ref)

    # Identity shortcut + residual.
    out_ref[0] = (x + t).astype(out_ref.dtype)


# ---------------------------------------------------------------------------
# Wrapper
# ---------------------------------------------------------------------------
def middle_flow_block(x_nchw, params):
    """x_nchw: (N, C, H, W) float32.
    params: list of 3 tuples (dw (3,3,C), pw (C,C), scale (1,C), bias (1,C))."""
    N, C, H, W = x_nchw.shape
    Wp = ((W + 7) // 8) * 8                      # sublane-align the W axis
    x = jnp.transpose(x_nchw, (0, 2, 3, 1))      # NHWC
    if Wp != W:
        x = jnp.pad(x, ((0, 0), (0, 0), (0, Wp - W), (0, 0)))

    # Host-side prep (free): fold BN scale into the pointwise weights and ship
    # them as bf16 (halves their HBM/VMEM footprint; MXU-native).  Depthwise
    # taps and BN bias stay f32 for the VPU.
    kern_args = []
    for dw, pw, scale, bias in params:
        kern_args += [dw.astype(jnp.float32),
                      (pw * scale.reshape(1, C)).astype(jnp.bfloat16),
                      bias.reshape(1, C).astype(jnp.float32)]

    if _roll_moves_to_higher_index():
        shift_back, shift_fwd = 1, Wp - 1        # out[w] = in[w-1] / in[w+1]
    else:
        shift_back, shift_fwd = Wp - 1, 1

    kernel = functools.partial(_middle_flow_kernel,
                               shift_back=shift_back,
                               shift_fwd=shift_fwd,
                               valid_w=W)

    # Weights are grid-invariant (constant index_map), so they are fetched
    # once.  If VMEM gets tight at C=728 on v7x, mark these pl.Buffered(1)
    # or stage them in scratch with a one-time copy.
    full = lambda shape: pl.BlockSpec(shape, lambda n: (0,) * len(shape))
    weight_specs = []
    for _ in range(3):
        weight_specs += [full((3, 3, C)), full((C, C)), full((1, C))]

    flops = N * 3 * (2 * H * Wp * C * C + 2 * 9 * H * Wp * C)
    bytes_accessed = (2 * N * H * Wp * C * 4
                      + 3 * (9 * C * 4 + C * C * 2 + C * 4))
    cost = pl.CostEstimate(flops=flops, transcendentals=0,
                           bytes_accessed=bytes_accessed)

    out = pl.pallas_call(
        kernel,
        out_shape=jax.ShapeDtypeStruct((N, H, Wp, C), x.dtype),
        grid_spec=pltpu.PrefetchScalarGridSpec(
            num_scalar_prefetch=0,
            grid=(N,),
            in_specs=[pl.BlockSpec((1, H, Wp, C), lambda n: (n, 0, 0, 0))]
                     + weight_specs,
            out_specs=pl.BlockSpec((1, H, Wp, C), lambda n: (n, 0, 0, 0)),
            scratch_shapes=[pltpu.VMEM((H + 2, Wp, C), jnp.float32)],
        ),
        compiler_params=pltpu.CompilerParams(
            # Batch axis feeds both TensorCores on multi-core parts (v7x).
            # For N == 1 on v7x, add a second parallel axis splitting H.
            dimension_semantics=("parallel",),
            # Above the 32 MiB scoped default, below v7x's 64 MiB physical.
            vmem_limit_bytes=48 * 1024 * 1024,
        ),
        cost_estimate=cost,
    )(x, *kern_args)

    if Wp != W:
        out = out[:, :, :W, :]
    return jnp.transpose(out, (0, 3, 1, 2))      # back to NCHW


# -------------------- pure-JAX reference (for verification) --------------------
def _ref_forward(x_nchw, params):
    x = jnp.transpose(x_nchw, (0, 2, 3, 1))      # NHWC
    C = x.shape[-1]
    t = x
    for dw, pw, scale, bias in params:
        t = jnp.maximum(t, 0.0)
        t = lax.conv_general_dilated(
            t, dw.reshape(3, 3, 1, C), (1, 1), 'SAME',
            dimension_numbers=('NHWC', 'HWIO', 'NHWC'),
            feature_group_count=C)
        t = lax.conv_general_dilated(
            t, pw.reshape(1, 1, C, C), (1, 1), 'SAME',
            dimension_numbers=('NHWC', 'HWIO', 'NHWC'))
        t = t * scale.reshape(1, 1, 1, C) + bias.reshape(1, 1, 1, C)
    out = x + t
    return jnp.transpose(out, (0, 3, 1, 2))


def _make_params(key, C, eps=1e-5):
    params = []
    for i in range(3):
        ks = jax.random.split(jax.random.fold_in(key, i), 6)
        dw = jax.random.normal(ks[0], (3, 3, C), jnp.float32) * 0.2
        pw = jax.random.normal(ks[1], (C, C), jnp.float32) * 0.2
        gamma = 1.0 + 0.1 * jax.random.normal(ks[2], (C,), jnp.float32)
        beta = 0.1 * jax.random.normal(ks[3], (C,), jnp.float32)
        running_mean = 0.1 * jax.random.normal(ks[4], (C,), jnp.float32)
        running_var = jnp.abs(jax.random.normal(ks[5], (C,), jnp.float32)) + 0.5
        scale = gamma / jnp.sqrt(running_var + eps)
        bias = beta - running_mean * scale
        params.append((dw, pw, scale.reshape(1, C), bias.reshape(1, C)))
    return params


if __name__ == "__main__":
    key = jax.random.PRNGKey(0)
    # Small stand-in for the 728-channel / 19x19 Xception block.  W=12 is
    # deliberately not a multiple of 8 to exercise the alignment-padding path.
    N, C, H, W = 2, 32, 10, 12
    kx, kp = jax.random.split(key)
    x = jax.random.normal(kx, (N, C, H, W), jnp.float32)
    params = _make_params(kp, C)

    out = middle_flow_block(x, params)
    out = jax.block_until_ready(out)

    ref = _ref_forward(x, params)
    assert out.shape == (N, C, H, W)
    # bf16 MXU operands + folded BN scale change rounding vs. the f32 reference.
    assert jnp.allclose(out, ref, atol=5e-2, rtol=5e-2), \
        f"max abs diff {jnp.max(jnp.abs(out - ref))}"

    print("KERNEL_OK")
</pallas_src>

<mosaic_0001>
module attributes {stable_mosaic.version = 11 : i64} {
  func.func @_probe_roll_kernel(%arg0: memref<8x128xf32, #tpu.memory_space<vmem>>, %arg1: memref<8x128xf32, #tpu.memory_space<vmem>>) attributes {dimension_semantics = [], scalar_prefetch = 0 : i64, scratch_operands = 0 : i64, tpu.core_type = #tpu.core_type<tc>} {
    %c0 = arith.constant 0 : index
    %c0_0 = arith.constant 0 : index
    %0 = vector.load %arg0[%c0, %c0_0] : memref<8x128xf32, #tpu.memory_space<vmem>>, vector<8x128xf32>
    %c1_i32 = arith.constant 1 : i32
    %1 = tpu.dynamic_rotate %0 by %c1_i32 dim 0 : vector<8x128xf32>, i32 -> vector<8x128xf32>
    %c0_1 = arith.constant 0 : index
    %c0_2 = arith.constant 0 : index
    %2 = vector.load %arg1[%c0_1, %c0_2] : memref<8x128xf32, #tpu.memory_space<vmem>>, vector<8x128xf32>
    tpu.vector_store %arg1[%c0_1, %c0_2], %1 {strides = array<i32>} : memref<8x128xf32, #tpu.memory_space<vmem>>, vector<8x128xf32>,
    return
  }
}

</mosaic_0001>

<llo_original>
// kernel: tpu_custom_call.1
$region0: #{tpu_custom_call.1}
  #allocation0 [shape = 'u32[]', space=smem, size = 0x4, offset = 0x4, fixed_abs, tag = 'smem constant byte address 0x4 - core index']
  #allocation1 [shape = 'u32[144,128]{1,0:T(1,128)}', space=vmem, size = 0x12000, scoped, tag = 'internal scratch']
  %s0 = inlined_call_operand.hbm [shape: f32[8,128], index: 0, kind: input, shape index: {}]
  %s1 = inlined_call_operand.hbm [shape: f32[8,128], index: 1, kind: output, shape index: {}]
  %s2 = sld [smem:[#allocation0]]
  $region18: #{tpu_custom_call.1} parent=0
    _
  %s4 = ssub.s32 1, %s2
  %s5 = scalar_select 0, %s4, %s2
  $region1: #{tpu_custom_call.1} parent=0
    #allocation2 [shape = 'u8[4096]{0}', space=vmem, size = 0x1000, scoped, tag = 'input window, operand 0, single buffered']
    #allocation3 [shape = 's32[1]{0}', space=sflag, size = 0x4, scoped, tag = 'scoped memory for tpu_custom_call.1']
    #allocation4 [shape = 's32[1]{0}', space=sflag, size = 0x4, scoped, tag = 'scoped memory for tpu_custom_call.1']
    #allocation5 [shape = 'u8[4096]{0}', space=vmem, size = 0x1000, scoped, tag = 'output window, operand 0, single buffered']
    %6 = vsyncpa [#allocation3], 0
    %7 = vsyncpa [#allocation4], 0
    // Predicated region
    $region2: #{tpu_custom_call.1} parent=1 // pred_check
      _
    $region3: #{tpu_custom_call.1} parent=1 // pred_check_branch
      %9 = sbr.rel (0) target = $region5
    $region4: #{tpu_custom_call.1} parent=1 // pred_region
      %s11 = ssub.s32 128, 128
      %12 = vsyncadd [#allocation3], %s11
      %s14 = sshll.u32 [#allocation2], 4
      %s15 = int_to_ptr.vmem [resolvable:$true] %s14
      %17 = dma.hbm_to_vmem [thread:$0]  %s0, 128, %s15, [#allocation3]
    $region5: #{tpu_custom_call.1} parent=1 // pred_fallthru
      _
    // Predicated region
    $region6: #{tpu_custom_call.1} parent=1 // pred_check
      _
    $region7: #{tpu_custom_call.1} parent=1 // pred_check_branch
      %19 = sbr.rel (0) target = $region9
    $region8: #{tpu_custom_call.1} parent=1 // pred_region
      %20 = dma.done [#allocation3], 128
    $region9: #{tpu_custom_call.1} parent=1 // pred_fallthru
      _
    %v21 = vld [vmem:[#allocation2] sm:$0xff]
    %v22 = vrot.slane %v21, 7
    %23 = vst [vmem:[#allocation5] sm:$0xff] %v22
    // Predicated region
    $region10: #{tpu_custom_call.1} parent=1 // pred_check
      _
    $region11: #{tpu_custom_call.1} parent=1 // pred_check_branch
      %25 = sbr.rel (0) target = $region13
    $region12: #{tpu_custom_call.1} parent=1 // pred_region
      %s27 = ssub.s32 128, 128
      %28 = vsyncadd [#allocation4], %s27
      %s30 = sshll.u32 [#allocation5], 4
      %s31 = int_to_ptr.vmem [resolvable:$true] %s30
      %33 = dma.vmem_to_hbm [thread:$0]  %s31, 128, %s1, [#allocation4]
    $region13: #{tpu_custom_call.1} parent=1 // pred_fallthru
      _
    // Predicated region
    $region14: #{tpu_custom_call.1} parent=1 // pred_check
      _
    $region15: #{tpu_custom_call.1} parent=1 // pred_check_branch
      %35 = sbr.rel (0) target = $region17
    $region16: #{tpu_custom_call.1} parent=1 // pred_region
      %36 = dma.done [#allocation4], 128
    $region17: #{tpu_custom_call.1} parent=1 // pred_fallthru
      _
    %37 = vsyncpa [#allocation3], 1
    %38 = vsyncpa [#allocation4], 1

</llo_original>
